<compile_context>
chip_gen: v5e
topology: v5e:2x2
jax: 0.10.0
libtpu: 0.0.40
codegen_flags: <defaults>
</compile_context>

<pallas_src>
import jax
import jax.numpy as jnp
from jax.experimental import pallas as pl
from jax.experimental.pallas import tpu as pltpu


N_INPUTS = 32      # n_inputs for the synthetic module
N_ACTIONS = 4      # unused by forward(); actor/critic heads are separate methods
H1, H2, H3 = 64, 128, 64

MAX_TB = 2048      # default batch tile for large batches (amortizes step overhead)
SPLIT_ROWS = 512   # on 2-TC chips, split the grid once the batch reaches this


def _mlp_kernel(x_ref, w1_ref, b1_ref, w2_ref, b2_ref, w3_ref, b3_ref, o_ref):
    """Fused 3-layer MLP, ReLU after every layer.

    Matmuls accumulate in f32 (preferred_element_type); operands may be bf16.
    Bias-add / ReLU epilogue and the output store stay in f32.
    """
    h = jnp.dot(x_ref[...], w1_ref[...], preferred_element_type=jnp.float32)
    h = jnp.maximum(h + b1_ref[...], 0.0)

    h = jnp.dot(h.astype(w2_ref.dtype), w2_ref[...],
                preferred_element_type=jnp.float32)
    h = jnp.maximum(h + b2_ref[...], 0.0)

    h = jnp.dot(h.astype(w3_ref.dtype), w3_ref[...],
                preferred_element_type=jnp.float32)
    h = jnp.maximum(h + b3_ref[...], 0.0)

    o_ref[...] = h.astype(o_ref.dtype)


def _round_up(n, m):
    return ((n + m - 1) // m) * m


def _cdiv(a, b):
    return -(-a // b)


def _tensorcores_per_device():
    """2 for chips that hide two TensorCores behind one device (v4/v7x), else 1."""
    try:
        kind = jax.devices()[0].device_kind.lower()
    except Exception:  # pragma: no cover - defensive; default to single core
        return 1
    if "v4" in kind or "v7" in kind:
        return 2
    return 1


def actor_critic_forward(x, w1, b1, w2, b2, w3, b3, *,
                         max_tb=MAX_TB, operand_dtype=jnp.float32):
    """Pallas implementation of ActorCritic.forward.

    x  : [B, n_inputs] float32
    w* : [in, out] float32, b*: [1, out] float32
    returns [B, 64] float32
    """
    B, n_in = x.shape
    h1, h2, h3 = w1.shape[1], w2.shape[1], w3.shape[1]

    # Optional bf16-operand path (bandwidth win); epilogue/output stay f32.
    op_dt = jnp.dtype(operand_dtype)
    if op_dt != x.dtype:
        x = x.astype(op_dt)
        w1, w2, w3 = w1.astype(op_dt), w2.astype(op_dt), w3.astype(op_dt)

    # --- batch tile selection (all static shape math, no array padding) -----
    sub = 16 if op_dt.itemsize < 4 else 8          # sublane granularity
    max_tb = max(sub, _round_up(max_tb, sub))
    b_eff = _round_up(B, sub)
    cores = _tensorcores_per_device()

    if b_eff <= max_tb:
        if cores >= 2 and b_eff >= SPLIT_ROWS:
            # Give both TensorCores a grid step (megacore sharding of "parallel").
            tb = _round_up(_cdiv(b_eff, cores), sub)
        else:
            tb = b_eff                              # single step: no per-step overhead
    else:
        tb = max_tb                                 # large batch: big tiles, ragged tail

    grid = (_cdiv(B, tb),)                          # Pallas masks the partial last block
    _resident = lambda i: (0, 0)                    # weights/biases stay resident

    out = pl.pallas_call(
        _mlp_kernel,
        out_shape=jax.ShapeDtypeStruct((B, h3), jnp.float32),
        grid_spec=pl.GridSpec(
            grid=grid,
            in_specs=[
                pl.BlockSpec((tb, n_in), lambda i: (i, 0)),   # x tile
                pl.BlockSpec((n_in, h1), _resident),          # w1
                pl.BlockSpec((1, h1), _resident),             # b1
                pl.BlockSpec((h1, h2), _resident),            # w2
                pl.BlockSpec((1, h2), _resident),             # b2
                pl.BlockSpec((h2, h3), _resident),            # w3
                pl.BlockSpec((1, h3), _resident),             # b3
            ],
            out_specs=pl.BlockSpec((tb, h3), lambda i: (i, 0)),
        ),
        compiler_params=pltpu.CompilerParams(
            dimension_semantics=("parallel",),
            # Only bump scoped VMEM if someone pushes tiles far past the default.
            vmem_limit_bytes=(48 * 1024 * 1024 if tb > 2048 else None),
        ),
    )(x, w1, b1, w2, b2, w3, b3)

    return out


actor_critic_forward = jax.jit(
    actor_critic_forward, static_argnames=("max_tb", "operand_dtype"))


def _init_linear(key, fan_in, fan_out):
    """Deterministic init mimicking nn.Linear default: U(-1/sqrt(fan_in), +)."""
    kw, kb = jax.random.split(key)
    bound = 1.0 / jnp.sqrt(float(fan_in))
    w = jax.random.uniform(kw, (fan_in, fan_out), jnp.float32, -bound, bound)
    b = jax.random.uniform(kb, (1, fan_out), jnp.float32, -bound, bound)
    return w, b


def _reference_forward(x, w1, b1, w2, b2, w3, b3):
    h = jnp.maximum(x @ w1 + b1, 0.0)
    h = jnp.maximum(h @ w2 + b2, 0.0)
    h = jnp.maximum(h @ w3 + b3, 0.0)
    return h


if __name__ == "__main__":
    key = jax.random.PRNGKey(0)
    kx, k1, k2, k3, kx2, kx3 = jax.random.split(key, 6)

    # Deterministic synthetic parameters (shapes from ActorCritic.__init__).
    w1, b1 = _init_linear(k1, N_INPUTS, H1)   # linear1: n_inputs -> 64
    w2, b2 = _init_linear(k2, H1, H2)         # linear2: 64 -> 128
    w3, b3 = _init_linear(k3, H2, H3)         # linear3: 128 -> 64
    # TODO(synk): actor/critic heads (get_action_probs / get_state_value), the
    # Python-loop calc_actual_state_values, and the reflect() loss are not part
    # of forward() and are left out of the kernel.

    # Case 1: sublane-aligned batch, single grid step.
    x = jax.random.normal(kx, (16, N_INPUTS), jnp.float32)
    out = jax.block_until_ready(actor_critic_forward(x, w1, b1, w2, b2, w3, b3))
    ref = _reference_forward(x, w1, b1, w2, b2, w3, b3)
    assert out.shape == (16, H3)
    assert jnp.allclose(out, ref, atol=1e-4, rtol=1e-4), "mismatch (B=16)"

    # Case 2: ragged batch — masked final (only) block, no wrapper-side padding.
    x2 = jax.random.normal(kx2, (13, N_INPUTS), jnp.float32)
    out2 = jax.block_until_ready(actor_critic_forward(x2, w1, b1, w2, b2, w3, b3))
    ref2 = _reference_forward(x2, w1, b1, w2, b2, w3, b3)
    assert out2.shape == (13, H3)
    assert jnp.allclose(out2, ref2, atol=1e-4, rtol=1e-4), "mismatch (B=13)"

    # Case 3: multi-step grid with a ragged last block (small max_tb to exercise
    # the large-batch tiling path at tiny sizes).
    x3 = jax.random.normal(kx3, (200, N_INPUTS), jnp.float32)
    out3 = jax.block_until_ready(
        actor_critic_forward(x3, w1, b1, w2, b2, w3, b3, max_tb=64))
    ref3 = _reference_forward(x3, w1, b1, w2, b2, w3, b3)
    assert out3.shape == (200, H3)
    assert jnp.allclose(out3, ref3, atol=1e-4, rtol=1e-4), "mismatch (B=200)"

    # Case 4: bf16-operand path (bandwidth optimization); f32 accumulate/output.
    out4 = jax.block_until_ready(
        actor_critic_forward(x, w1, b1, w2, b2, w3, b3,
                             operand_dtype=jnp.bfloat16))
    assert out4.shape == (16, H3)
    assert jnp.allclose(out4, ref, atol=5e-2, rtol=5e-2), "mismatch (bf16 path)"

    print("KERNEL_OK")
</pallas_src>

<mosaic_0001>
module attributes {stable_mosaic.version = 11 : i64} {
  func.func @_mlp_kernel(%arg0: i32, %arg1: memref<16x32xf32, #tpu.memory_space<vmem>>, %arg2: memref<32x64xf32, #tpu.memory_space<vmem>>, %arg3: memref<1x64xf32, #tpu.memory_space<vmem>>, %arg4: memref<64x128xf32, #tpu.memory_space<vmem>>, %arg5: memref<1x128xf32, #tpu.memory_space<vmem>>, %arg6: memref<128x64xf32, #tpu.memory_space<vmem>>, %arg7: memref<1x64xf32, #tpu.memory_space<vmem>>, %arg8: memref<16x64xf32, #tpu.memory_space<vmem>>) attributes {dimension_semantics = [#tpu.dimension_semantics<parallel>], iteration_bounds = array<i64: 1>, scalar_prefetch = 0 : i64, scratch_operands = 0 : i64, tpu.core_type = #tpu.core_type<tc>, window_params = [{transform_indices = @transform_0, window_bounds = array<i64: 16, 32>}, {pipeline_mode = #tpu.pipeline_mode<synchronous>, transform_indices = @transform_1, window_bounds = array<i64: 32, 64>}, {pipeline_mode = #tpu.pipeline_mode<synchronous>, transform_indices = @transform_2, window_bounds = array<i64: 1, 64>}, {pipeline_mode = #tpu.pipeline_mode<synchronous>, transform_indices = @transform_3, window_bounds = array<i64: 64, 128>}, {pipeline_mode = #tpu.pipeline_mode<synchronous>, transform_indices = @transform_4, window_bounds = array<i64: 1, 128>}, {pipeline_mode = #tpu.pipeline_mode<synchronous>, transform_indices = @transform_5, window_bounds = array<i64: 128, 64>}, {pipeline_mode = #tpu.pipeline_mode<synchronous>, transform_indices = @transform_6, window_bounds = array<i64: 1, 64>}, {transform_indices = @transform_7, window_bounds = array<i64: 16, 64>}]} {
    %c0 = arith.constant 0 : index
    %c0_0 = arith.constant 0 : index
    %0 = vector.load %arg1[%c0, %c0_0] : memref<16x32xf32, #tpu.memory_space<vmem>>, vector<16x32xf32>
    %c0_1 = arith.constant 0 : index
    %c0_2 = arith.constant 0 : index
    %1 = vector.load %arg2[%c0_1, %c0_2] : memref<32x64xf32, #tpu.memory_space<vmem>>, vector<32x64xf32>
    %cst = arith.constant dense<0.000000e+00> : vector<16x64xf32>
    %2 = tpu.matmul %0, %1, %cst {dimension_numbers = #tpu.dot_dimension_numbers<[1], [0], [0], [1], [0, 0, 1, 1], [], []>} : vector<16x32xf32>, vector<32x64xf32>, vector<16x64xf32> -> vector<16x64xf32>
    %c0_3 = arith.constant 0 : index
    %c0_4 = arith.constant 0 : index
    %3 = vector.load %arg3[%c0_3, %c0_4] : memref<1x64xf32, #tpu.memory_space<vmem>>, vector<1x64xf32>
    %4 = vector.broadcast %3 : vector<1x64xf32> to vector<16x64xf32>
    %5 = arith.addf %2, %4 : vector<16x64xf32>
    %cst_5 = arith.constant 0.000000e+00 : f32
    %6 = vector.broadcast %cst_5 : f32 to vector<16x64xf32>
    %7 = arith.maximumf %5, %6 : vector<16x64xf32>
    %c0_6 = arith.constant 0 : index
    %c0_7 = arith.constant 0 : index
    %8 = vector.load %arg4[%c0_6, %c0_7] : memref<64x128xf32, #tpu.memory_space<vmem>>, vector<64x128xf32>
    %cst_8 = arith.constant dense<0.000000e+00> : vector<16x128xf32>
    %9 = tpu.matmul %7, %8, %cst_8 {dimension_numbers = #tpu.dot_dimension_numbers<[1], [0], [0], [1], [0, 0, 1, 1], [], []>} : vector<16x64xf32>, vector<64x128xf32>, vector<16x128xf32> -> vector<16x128xf32>
    %c0_9 = arith.constant 0 : index
    %c0_10 = arith.constant 0 : index
    %10 = vector.load %arg5[%c0_9, %c0_10] : memref<1x128xf32, #tpu.memory_space<vmem>>, vector<1x128xf32>
    %11 = vector.broadcast %10 : vector<1x128xf32> to vector<16x128xf32>
    %12 = arith.addf %9, %11 : vector<16x128xf32>
    %cst_11 = arith.constant 0.000000e+00 : f32
    %13 = vector.broadcast %cst_11 : f32 to vector<16x128xf32>
    %14 = arith.maximumf %12, %13 : vector<16x128xf32>
    %c0_12 = arith.constant 0 : index
    %c0_13 = arith.constant 0 : index
    %15 = vector.load %arg6[%c0_12, %c0_13] : memref<128x64xf32, #tpu.memory_space<vmem>>, vector<128x64xf32>
    %cst_14 = arith.constant dense<0.000000e+00> : vector<16x64xf32>
    %16 = tpu.matmul %14, %15, %cst_14 {dimension_numbers = #tpu.dot_dimension_numbers<[1], [0], [0], [1], [0, 0, 1, 1], [], []>} : vector<16x128xf32>, vector<128x64xf32>, vector<16x64xf32> -> vector<16x64xf32>
    %c0_15 = arith.constant 0 : index
    %c0_16 = arith.constant 0 : index
    %17 = vector.load %arg7[%c0_15, %c0_16] : memref<1x64xf32, #tpu.memory_space<vmem>>, vector<1x64xf32>
    %18 = vector.broadcast %17 : vector<1x64xf32> to vector<16x64xf32>
    %19 = arith.addf %16, %18 : vector<16x64xf32>
    %cst_17 = arith.constant 0.000000e+00 : f32
    %20 = vector.broadcast %cst_17 : f32 to vector<16x64xf32>
    %21 = arith.maximumf %19, %20 : vector<16x64xf32>
    %c0_18 = arith.constant 0 : index
    %c0_19 = arith.constant 0 : index
    %22 = vector.load %arg8[%c0_18, %c0_19] : memref<16x64xf32, #tpu.memory_space<vmem>>, vector<16x64xf32>
    tpu.vector_store %arg8[%c0_18, %c0_19], %21 {strides = array<i32>} : memref<16x64xf32, #tpu.memory_space<vmem>>, vector<16x64xf32>,
    return
  }
  func.func @transform_0(%arg0: i32) -> (i32, i32) {
    %c0_i32 = arith.constant 0 : i32
    %c0_i32_0 = arith.constant 0 : i32
    return %arg0, %c0_i32 : i32, i32
  }
  func.func @transform_1(%arg0: i32) -> (i32, i32) {
    %c0_i32 = arith.constant 0 : i32
    %c0_i32_0 = arith.constant 0 : i32
    %c0_i32_1 = arith.constant 0 : i32
    return %c0_i32, %c0_i32_0 : i32, i32
  }
  func.func @transform_2(%arg0: i32) -> (i32, i32) {
    %c0_i32 = arith.constant 0 : i32
    %c0_i32_0 = arith.constant 0 : i32
    %c0_i32_1 = arith.constant 0 : i32
    return %c0_i32, %c0_i32_0 : i32, i32
  }
  func.func @transform_3(%arg0: i32) -> (i32, i32) {
    %c0_i32 = arith.constant 0 : i32
    %c0_i32_0 = arith.constant 0 : i32
    %c0_i32_1 = arith.constant 0 : i32
    return %c0_i32, %c0_i32_0 : i32, i32
  }
  func.func @transform_4(%arg0: i32) -> (i32, i32) {
    %c0_i32 = arith.constant 0 : i32
    %c0_i32_0 = arith.constant 0 : i32
    %c0_i32_1 = arith.constant 0 : i32
    return %c0_i32, %c0_i32_0 : i32, i32
  }
  func.func @transform_5(%arg0: i32) -> (i32, i32) {
    %c0_i32 = arith.constant 0 : i32
    %c0_i32_0 = arith.constant 0 : i32
    %c0_i32_1 = arith.constant 0 : i32
    return %c0_i32, %c0_i32_0 : i32, i32
  }
  func.func @transform_6(%arg0: i32) -> (i32, i32) {
    %c0_i32 = arith.constant 0 : i32
    %c0_i32_0 = arith.constant 0 : i32
    %c0_i32_1 = arith.constant 0 : i32
    return %c0_i32, %c0_i32_0 : i32, i32
  }
  func.func @transform_7(%arg0: i32) -> (i32, i32) {
    %c0_i32 = arith.constant 0 : i32
    %c0_i32_0 = arith.constant 0 : i32
    return %arg0, %c0_i32 : i32, i32
  }
}

</mosaic_0001>

<llo_original>
// kernel: actor_critic_forward.1
$region0: #{actor_critic_forward.1}
  #allocation0 [shape = 'u32[]', space=smem, size = 0x4, offset = 0x4, fixed_abs, tag = 'smem constant byte address 0x4 - core index']
  #allocation1 [shape = 'u32[72,128]{1,0:T(1,128)}', space=vmem, size = 0x9000, scoped, tag = 'internal scratch']
  %s0 = inlined_call_operand.vmem [shape: f32[16,32], index: 0, kind: input, shape index: {}]
  %s1 = inlined_call_operand.vmem [shape: f32[32,64], index: 1, kind: input, shape index: {}]
  %s2 = inlined_call_operand.vmem [shape: f32[1,64], index: 2, kind: input, shape index: {}]
  %s3 = inlined_call_operand.vmem [shape: f32[64,128], index: 3, kind: input, shape index: {}]
  %s4 = inlined_call_operand.vmem [shape: f32[1,128], index: 4, kind: input, shape index: {}]
  %s5 = inlined_call_operand.vmem [shape: f32[128,64], index: 5, kind: input, shape index: {}]
  %s6 = inlined_call_operand.vmem [shape: f32[1,64], index: 6, kind: input, shape index: {}]
  %s7 = inlined_call_operand.hbm [shape: f32[16,64], index: 7, kind: output, shape index: {}]
  %s8 = sld [smem:[#allocation0]]
  $region38: #{actor_critic_forward.1} parent=0
    _
  %s10 = ssub.s32 1, %s8
  %s11 = scalar_select 0, %s10, %s8
  $region1: #{actor_critic_forward.1} parent=0
    #allocation2 [shape = 'u8[8192]{0}', space=vmem, size = 0x2000, scoped, tag = 'output window, operand 0, single buffered']
    #allocation3 [shape = 's32[1]{0}', space=sflag, size = 0x4, scoped, tag = 'scoped memory for actor_critic_forward.1']
    %12 = vsyncpa [#allocation3], 0
    // Predicated region
    $region2: #{actor_critic_forward.1} parent=1 // pred_check
      _
    $region3: #{actor_critic_forward.1} parent=1 // pred_check_branch
      %14 = sbr.rel (0) target = $region5
    $region4: #{actor_critic_forward.1} parent=1 // pred_region
      _
    $region5: #{actor_critic_forward.1} parent=1 // pred_fallthru
      _
    // Predicated region
    $region6: #{actor_critic_forward.1} parent=1 // pred_check
      _
    $region7: #{actor_critic_forward.1} parent=1 // pred_check_branch
      %16 = sbr.rel (0) target = $region9
    $region8: #{actor_critic_forward.1} parent=1 // pred_region
      _
    $region9: #{actor_critic_forward.1} parent=1 // pred_fallthru
      _
    // Predicated region
    $region10: #{actor_critic_forward.1} parent=1 // pred_check
      _
    $region11: #{actor_critic_forward.1} parent=1 // pred_check_branch
      %18 = sbr.rel (0) target = $region13
    $region12: #{actor_critic_forward.1} parent=1 // pred_region
      _
    $region13: #{actor_critic_forward.1} parent=1 // pred_fallthru
      _
    // Predicated region
    $region14: #{actor_critic_forward.1} parent=1 // pred_check
      _
    $region15: #{actor_critic_forward.1} parent=1 // pred_check_branch
      %20 = sbr.rel (0) target = $region17
    $region16: #{actor_critic_forward.1} parent=1 // pred_region
      _
    $region17: #{actor_critic_forward.1} parent=1 // pred_fallthru
      _
    // Predicated region
    $region18: #{actor_critic_forward.1} parent=1 // pred_check
      _
    $region19: #{actor_critic_forward.1} parent=1 // pred_check_branch
      %22 = sbr.rel (0) target = $region21
    $region20: #{actor_critic_forward.1} parent=1 // pred_region
      _
    $region21: #{actor_critic_forward.1} parent=1 // pred_fallthru
      _
    // Predicated region
    $region22: #{actor_critic_forward.1} parent=1 // pred_check
      _
    $region23: #{actor_critic_forward.1} parent=1 // pred_check_branch
      %24 = sbr.rel (0) target = $region25
    $region24: #{actor_critic_forward.1} parent=1 // pred_region
      _
    $region25: #{actor_critic_forward.1} parent=1 // pred_fallthru
      _
    // Predicated region
    $region26: #{actor_critic_forward.1} parent=1 // pred_check
      _
    $region27: #{actor_critic_forward.1} parent=1 // pred_check_branch
      %26 = sbr.rel (0) target = $region29
    $region28: #{actor_critic_forward.1} parent=1 // pred_region
      _
    $region29: #{actor_critic_forward.1} parent=1 // pred_fallthru
      _
    %v27 = vld [vmem:[%s0] sm:$0xff]
    %v28 = vld [vmem:[%s0 + $0x8] sm:$0xff]
    %v29 = vld [vmem:[%s1] sm:$0xff]
    %v30 = vld [vmem:[%s1 + $0x8] sm:$0xff]
    %v31 = vld [vmem:[%s1 + $0x10] sm:$0xff]
    %v32 = vld [vmem:[%s1 + $0x18] sm:$0xff]
    %v33 = vld [vmem:[%s2] sm:$0x1]
    %v35 = vperm.slane %v33, 0
    %vm37 = vcmask 261120
    %v39 = vsel %vm37, %v27, 0
    %v42 = vsel %vm37, %v28, 0
    %44 = vmatpush.msra.mxu0 0.0
    %45 = vmatpush.msra.mxu0 0.0
    %46 = vmatpush.msra.mxu0 0.0
    %47 = vmatpush.msra.mxu0 0.0
    %48 = vmatpush.msra.mxu0 0.0
    %49 = vmatpush.msra.mxu0 0.0
    %50 = vmatpush.msra.mxu0 0.0
    %51 = vmatpush.msra.mxu0 0.0
    %52 = vmatpush.msra.mxu0 0.0
    %53 = vmatpush.msra.mxu0 0.0
    %54 = vmatpush.msra.mxu0 0.0
    %55 = vmatpush.msra.mxu0 0.0
    %56 = vmatpush.msra.mxu0 %v32
    %57 = vmatpush.msra.mxu0 %v31
    %58 = vmatpush.msra.mxu0 %v30
    %59 = vmatpush.msra.mxu0 %v29
    %60 = vmatmul.f32.gmra.mxu0 %v39
    %v61 = vpop.f32.mrf.mxu0
    %v62 = vadd.f32 %v35, %v61
    %63 = vmatmul.f32.gmra.mxu0 %v42
    %v64 = vpop.f32.mrf.mxu0
    %v65 = vadd.f32 %v35, %v64
    %66 = vdwg.mxu0
    %v67 = vmax.f32 %v62, 0.0
    %v68 = vmax.f32 %v65, 0.0
    %v69 = vld [vmem:[%s3] sm:$0xff]
    %v70 = vld [vmem:[%s3 + $0x8] sm:$0xff]
    %v71 = vld [vmem:[%s3 + $0x10] sm:$0xff]
    %v72 = vld [vmem:[%s3 + $0x18] sm:$0xff]
    %v73 = vld [vmem:[%s3 + $0x20] sm:$0xff]
    %v74 = vld [vmem:[%s3 + $0x28] sm:$0xff]
    %v75 = vld [vmem:[%s3 + $0x30] sm:$0xff]
    %v76 = vld [vmem:[%s3 + $0x38] sm:$0xff]
    %v77 = vld [vmem:[%s4] sm:$0x1]
    %v79 = vperm.slane %v77, 0
    %vm81 = vcmask 523264
    %v83 = vsel %vm81, %v67, 0
    %v86 = vsel %vm81, %v68, 0
    %88 = vmatpush.msra.mxu0 0.0
    %89 = vmatpush.msra.mxu0 0.0
    %90 = vmatpush.msra.mxu0 0.0
    %91 = vmatpush.msra.mxu0 0.0
    %92 = vmatpush.msra.mxu0 0.0
    %93 = vmatpush.msra.mxu0 0.0
    %94 = vmatpush.msra.mxu0 0.0
    %95 = vmatpush.msra.mxu0 0.0
    %96 = vmatpush.msra.mxu0 %v76
    %97 = vmatpush.msra.mxu0 %v75
    %98 = vmatpush.msra.mxu0 %v74
    %99 = vmatpush.msra.mxu0 %v73
    %100 = vmatpush.msra.mxu0 %v72
    %101 = vmatpush.msra.mxu0 %v71
    %102 = vmatpush.msra.mxu0 %v70
    %103 = vmatpush.msra.mxu0 %v69
    %104 = vmatmul.f32.gmra.mxu0 %v83
    %v105 = vpop.f32.mrf.mxu0
    %v106 = vadd.f32 %v79, %v105
    %107 = vmatmul.f32.gmra.mxu0 %v86
    %v108 = vpop.f32.mrf.mxu0
    %v109 = vadd.f32 %v79, %v108
    %110 = vdwg.mxu0
    %v111 = vmax.f32 %v106, 0.0
    %v112 = vmax.f32 %v109, 0.0
    %v113 = vld [vmem:[%s5] sm:$0xff]
    %v114 = vld [vmem:[%s5 + $0x8] sm:$0xff]
    %v115 = vld [vmem:[%s5 + $0x10] sm:$0xff]
    %v116 = vld [vmem:[%s5 + $0x18] sm:$0xff]
    %v117 = vld [vmem:[%s5 + $0x20] sm:$0xff]
    %v118 = vld [vmem:[%s5 + $0x28] sm:$0xff]
    %v119 = vld [vmem:[%s5 + $0x30] sm:$0xff]
    %v120 = vld [vmem:[%s5 + $0x38] sm:$0xff]
    %v121 = vld [vmem:[%s5 + $0x40] sm:$0xff]
    %v122 = vld [vmem:[%s5 + $0x48] sm:$0xff]
    %v123 = vld [vmem:[%s5 + $0x50] sm:$0xff]
    %v124 = vld [vmem:[%s5 + $0x58] sm:$0xff]
    %v125 = vld [vmem:[%s5 + $0x60] sm:$0xff]
    %v126 = vld [vmem:[%s5 + $0x68] sm:$0xff]
    %v127 = vld [vmem:[%s5 + $0x70] sm:$0xff]
    %v128 = vld [vmem:[%s5 + $0x78] sm:$0xff]
    %v129 = vld [vmem:[%s6] sm:$0x1]
    %v131 = vperm.slane %v129, 0
    %133 = vmatpush.msra.mxu0 %v128
    %134 = vmatpush.msra.mxu0 %v127
    %135 = vmatpush.msra.mxu0 %v126
    %136 = vmatpush.msra.mxu0 %v125
    %137 = vmatpush.msra.mxu0 %v124
    %138 = vmatpush.msra.mxu0 %v123
    %139 = vmatpush.msra.mxu0 %v122
    %140 = vmatpush.msra.mxu0 %v121
    %141 = vmatpush.msra.mxu0 %v120
    %142 = vmatpush.msra.mxu0 %v119
    %143 = vmatpush.msra.mxu0 %v118
    %144 = vmatpush.msra.mxu0 %v117
    %145 = vmatpush.msra.mxu0 %v116
    %146 = vmatpush.msra.mxu0 %v115
    %147 = vmatpush.msra.mxu0 %v114
    %148 = vmatpush.msra.mxu0 %v113
    %149 = vmatmul.f32.gmra.mxu0 %v111
    %v150 = vpop.f32.mrf.mxu0
    %v151 = vadd.f32 %v131, %v150
    %152 = vmatmul.f32.gmra.mxu0 %v112
    %v153 = vpop.f32.mrf.mxu0
    %v154 = vadd.f32 %v131, %v153
    %155 = vdwg.mxu0
    %v156 = vmax.f32 %v151, 0.0
    %v157 = vmax.f32 %v154, 0.0
    %158 = vst.msk [vmem:[#allocation2] sm:$0xff] %vm81, %v156
    %159 = vst.msk [vmem:[#allocation2 + $0x8] sm:$0xff] %vm81, %v157
    // Predicated region
    $region30: #{actor_critic_forward.1} parent=1 // pred_check
      _
    $region31: #{actor_critic_forward.1} parent=1 // pred_check_branch
      %161 = sbr.rel (0) target = $region33
    $region32: #{actor_critic_forward.1} parent=1 // pred_region
      %163 = vsyncadd [#allocation3], 0
      %s164 = sshll.u32 [#allocation2], 4
      %s165 = int_to_ptr.vmem [resolvable:$true] %s164
      %s166 = sshll.u32 %s7, 4
      %s167 = int_to_ptr.hbm [resolvable:$true] %s166
      %172 = dma.vmem_to_hbm [thread:$0]  %s165, 256, %s167, [#allocation3], 128, 128, 8
    $region33: #{actor_critic_forward.1} parent=1 // pred_fallthru
      _
    // Predicated region
    $region34: #{actor_critic_forward.1} parent=1 // pred_check
      _
    $region35: #{actor_critic_forward.1} parent=1 // pred_check_branch
      %174 = sbr.rel (0) target = $region37
    $region36: #{actor_critic_forward.1} parent=1 // pred_region
      %176 = dma.done [#allocation3], 256
    $region37: #{actor_critic_forward.1} parent=1 // pred_fallthru
      _
    %177 = vsyncpa [#allocation3], 1

</llo_original>
